<compile_context>
chip_gen: v7x
topology: tpu7x:2x2x1
jax: 0.10.0
libtpu: 0.0.40
codegen_flags: <defaults>
</compile_context>

<pallas_src>
import functools

import jax
import jax.numpy as jnp
from jax.experimental import pallas as pl
from jax.experimental.pallas import tpu as pltpu

BN_EPS = 1e-5


def _as_pair(v):
    return tuple(v) if isinstance(v, (tuple, list)) else (v, v)


# ----------------------------------------------------------------------------
# Pallas kernel: K-packed single MXU dot + folded-BN bias + ReLU, lane-dense out
# ----------------------------------------------------------------------------
def _conv_bn_relu_kernel(x_ref, w_ref, b_ref, o_ref, *, tap_offsets, L):
    """One batch image per grid step.

    x_ref: (Cin, Lpad)        bf16  padded image, spatial flattened on lanes
    w_ref: (Cout, kk*Cin)     bf16  flipped weights, BN scale pre-folded
    b_ref: (Cout, 1)          f32   folded BN bias
    o_ref: (Cout, L=Ho*Wp)    f32   flattened (row-stride Wp) output
    """
    x = x_ref[...]            # load padded image once
    w = w_ref[...]            # load all packed weights once

    # Patch slab: tap (kh, kw) is a static lane-offset slice of the flattened
    # padded image; concatenating along sublanes packs all taps into K.
    slab = jnp.concatenate([x[:, off:off + L] for off in tap_offsets], axis=0)

    # Single MXU dot, K = kH*kW*Cin, output lanes = flattened spatial (dense).
    acc = jnp.dot(w, slab, preferred_element_type=jnp.float32)   # (Cout, L)

    o_ref[...] = jnp.maximum(acc + b_ref[...], 0.0)              # f32 epilogue


# ----------------------------------------------------------------------------
# BasicConv2d forward (NCHW in / NCHW out, like PyTorch)
# ----------------------------------------------------------------------------
@functools.partial(
    jax.jit, static_argnames=("kernel_size", "stride", "padding", "dilation"))
def basic_conv2d(x_nchw, params, *, kernel_size, stride=1, padding=0,
                 dilation=1):
    kH, kW = _as_pair(kernel_size)
    sH, sW = _as_pair(stride)
    pH, pW = _as_pair(padding)
    dH, dW = _as_pair(dilation)

    N, Cin, H, W = x_nchw.shape
    Cout = params["w"].shape[1]

    x = x_nchw.astype(jnp.bfloat16)        # bf16 MXU operand; fuses with pad

    # ConvTranspose2d stride s == insert (s-1) zeros between input samples,
    # then a stride-1 transposed conv (handled below).
    if sH > 1 or sW > 1:
        Hu, Wu = (H - 1) * sH + 1, (W - 1) * sW + 1
        x = jnp.zeros((N, Cin, Hu, Wu), x.dtype).at[:, :, ::sH, ::sW].set(x)
        H, W = Hu, Wu

    # stride-1 ConvTranspose2d(pad=p, dil=d) == dilated cross-correlation with
    # the spatially flipped kernel and padding d*(k-1) - p (crop if negative).
    eh = dH * (kH - 1) - pH
    ew = dW * (kW - 1) - pW
    if eh < 0:
        x = x[:, :, -eh:H + eh, :]
        H = H + 2 * eh
    if ew < 0:
        x = x[:, :, :, -ew:W + ew]
        W = W + 2 * ew
    ph, pw = max(eh, 0), max(ew, 0)

    Hp, Wp = H + 2 * ph, W + 2 * pw                  # logical padded image
    Ho, Wo = Hp - dH * (kH - 1), Wp - dW * (kW - 1)  # conv output size
    assert Ho >= 1 and Wo >= 1, (Ho, Wo)

    # Flattened tap slices reach up to Hp*Wp + dW*(kW-1); fold that tail slack
    # into the SAME pad as extra all-zero bottom rows (keeps it one XLA pad).
    tail = dW * (kW - 1)
    extra_rows = -(-tail // Wp) if tail > 0 else 0
    x = jnp.pad(x, ((0, 0), (0, 0), (ph, ph + extra_rows), (pw, pw)))
    Lpad = (Hp + extra_rows) * Wp
    x_flat = x.reshape(N, Cin, Lpad)       # free reshape; spatial on lanes

    L = Ho * Wp                            # output row stride = Wp (garbage
    #                                        columns w in [Wo, Wp) sliced later)
    tap_offsets = tuple(kh * dH * Wp + kw * dW
                        for kh in range(kH) for kw in range(kW))
    KK = kH * kW * Cin

    # Fold inference-mode BatchNorm into the conv weights + per-channel bias.
    scale = params["gamma"] / jnp.sqrt(params["var"] + BN_EPS)          # (Cout,)
    bias = (params["beta"] - params["mean"] * scale).reshape(Cout, 1)
    w = jnp.flip(params["w"], axis=(2, 3))           # (Cin, Cout, kH, kW)
    w = jnp.transpose(w, (1, 2, 3, 0))               # (Cout, kH, kW, Cin)
    w = (w * scale[:, None, None, None]).reshape(Cout, KK)

    kern = functools.partial(_conv_bn_relu_kernel,
                             tap_offsets=tap_offsets, L=L)

    out = pl.pallas_call(
        kern,
        out_shape=jax.ShapeDtypeStruct((N, Cout, L), jnp.float32),
        grid=(N,),
        in_specs=[
            pl.BlockSpec((None, Cin, Lpad), lambda n: (n, 0, 0)),
            # grid-invariant weights / bias (tiny; Buffered(1) not worth risk)
            pl.BlockSpec((Cout, KK), lambda n: (0, 0)),
            pl.BlockSpec((Cout, 1), lambda n: (0, 0)),
        ],
        out_specs=pl.BlockSpec((None, Cout, L), lambda n: (n, 0, 0)),
        compiler_params=pltpu.CompilerParams(
            dimension_semantics=("parallel",),
            vmem_limit_bytes=32 * 1024 * 1024),
    )(x_flat, w.astype(jnp.bfloat16), bias.astype(jnp.float32))

    # Drop the (Wp - Wo) garbage columns of each flattened row; already NCHW.
    return out.reshape(N, Cout, Ho, Wp)[:, :, :, :Wo]


# ----------------------------------------------------------------------------
# Pure-JAX reference (independent path via lax.conv_general_dilated)
# ----------------------------------------------------------------------------
def basic_conv2d_reference(x_nchw, params, *, kernel_size, stride=1, padding=0,
                           dilation=1):
    kH, kW = _as_pair(kernel_size)
    sH, sW = _as_pair(stride)
    pH, pW = _as_pair(padding)
    dH, dW = _as_pair(dilation)
    v = jnp.transpose(jnp.flip(params["w"], (2, 3)), (1, 0, 2, 3))  # OIHW
    y = jax.lax.conv_general_dilated(
        x_nchw, v, window_strides=(1, 1),
        padding=((dH * (kH - 1) - pH,) * 2, (dW * (kW - 1) - pW,) * 2),
        lhs_dilation=(sH, sW), rhs_dilation=(dH, dW),
        dimension_numbers=("NCHW", "OIHW", "NCHW"))
    scale = params["gamma"] / jnp.sqrt(params["var"] + BN_EPS)
    bias = params["beta"] - params["mean"] * scale
    y = y * scale[None, :, None, None] + bias[None, :, None, None]
    return jnp.maximum(y, 0.0)


# ----------------------------------------------------------------------------
# Deterministic synthetic parameters (not a checkpoint)
# ----------------------------------------------------------------------------
def init_params(key, cin, cout, kh, kw):
    k1, k2, k3, k4, k5 = jax.random.split(key, 5)
    return dict(
        w=jax.random.normal(k1, (cin, cout, kh, kw), jnp.float32) * 0.1,
        gamma=jax.random.uniform(k2, (cout,), jnp.float32, 0.5, 1.5),
        beta=jax.random.normal(k3, (cout,), jnp.float32) * 0.1,
        mean=jax.random.normal(k4, (cout,), jnp.float32) * 0.1,
        var=jax.random.uniform(k5, (cout,), jnp.float32, 0.5, 1.5),
    )


def _out_hw(size, k, s, p, d):
    return (size - 1) * s - 2 * p + d * (k - 1) + 1


if __name__ == "__main__":
    key = jax.random.PRNGKey(0)
    kx, kp1, kp2, kp3 = jax.random.split(key, 4)

    N, Cin, H, W = 2, 16, 16, 16
    Cout = 32
    x = jax.random.normal(kx, (N, Cin, H, W), jnp.float32)   # NCHW like torch

    configs = [
        dict(kernel_size=3, stride=1, padding=1, dilation=1),
        dict(kernel_size=3, stride=1, padding=3, dilation=3),  # dilated
        dict(kernel_size=3, stride=2, padding=1, dilation=1),  # upsampling
    ]
    for kp, cfg in zip([kp1, kp2, kp3], configs):
        kH, kW = _as_pair(cfg["kernel_size"])
        params = init_params(kp, Cin, Cout, kH, kW)

        y = basic_conv2d(x, params, **cfg)
        y = jax.block_until_ready(y)
        y_ref = basic_conv2d_reference(x, params, **cfg)

        Ho = _out_hw(H, kH, _as_pair(cfg["stride"])[0],
                     _as_pair(cfg["padding"])[0], _as_pair(cfg["dilation"])[0])
        Wo = _out_hw(W, kW, _as_pair(cfg["stride"])[1],
                     _as_pair(cfg["padding"])[1], _as_pair(cfg["dilation"])[1])
        assert y.shape == y_ref.shape == (N, Cout, Ho, Wo), (y.shape, y_ref.shape)
        assert y.dtype == jnp.float32
        assert bool(jnp.all(y >= 0.0))                        # final ReLU
        max_err = float(jnp.max(jnp.abs(y - y_ref)))
        assert bool(jnp.allclose(y, y_ref, atol=2e-2, rtol=2e-2)), max_err

    print("KERNEL_OK")
</pallas_src>

<mosaic_0001>
module attributes {stable_mosaic.version = 11 : i64} {
  func.func @_conv_bn_relu_kernel(%arg0: i32, %arg1: memref<1x16x342xbf16, #tpu.memory_space<vmem>>, %arg2: memref<32x144xbf16, #tpu.memory_space<vmem>>, %arg3: memref<32x1xf32, #tpu.memory_space<vmem>>, %arg4: memref<1x32x288xf32, #tpu.memory_space<vmem>>) attributes {dimension_semantics = [#tpu.dimension_semantics<parallel>], iteration_bounds = array<i64: 2>, scalar_prefetch = 0 : i64, scratch_operands = 0 : i64, tpu.core_type = #tpu.core_type<tc>, window_params = [{transform_indices = @transform_0, window_bounds = array<i64: 1, 16, 342>}, {pipeline_mode = #tpu.pipeline_mode<synchronous>, transform_indices = @transform_1, window_bounds = array<i64: 32, 144>}, {pipeline_mode = #tpu.pipeline_mode<synchronous>, transform_indices = @transform_2, window_bounds = array<i64: 32, 1>}, {transform_indices = @transform_3, window_bounds = array<i64: 1, 32, 288>}]} {
    %c0 = arith.constant 0 : index
    %c0_0 = arith.constant 0 : index
    %c0_1 = arith.constant 0 : index
    %0 = vector.load %arg1[%c0, %c0_0, %c0_1] : memref<1x16x342xbf16, #tpu.memory_space<vmem>>, vector<1x16x342xbf16>
    %1 = vector.shape_cast %0 : vector<1x16x342xbf16> to vector<16x342xbf16>
    %c0_2 = arith.constant 0 : index
    %c0_3 = arith.constant 0 : index
    %2 = vector.load %arg2[%c0_2, %c0_3] : memref<32x144xbf16, #tpu.memory_space<vmem>>, vector<32x144xbf16>
    %3 = vector.extract_strided_slice %1 {offsets = [0, 0], sizes = [16, 288], strides = [1, 1]} : vector<16x342xbf16> to vector<16x288xbf16>
    %4 = vector.extract_strided_slice %1 {offsets = [0, 1], sizes = [16, 288], strides = [1, 1]} : vector<16x342xbf16> to vector<16x288xbf16>
    %5 = vector.extract_strided_slice %1 {offsets = [0, 2], sizes = [16, 288], strides = [1, 1]} : vector<16x342xbf16> to vector<16x288xbf16>
    %6 = vector.extract_strided_slice %1 {offsets = [0, 18], sizes = [16, 288], strides = [1, 1]} : vector<16x342xbf16> to vector<16x288xbf16>
    %7 = vector.extract_strided_slice %1 {offsets = [0, 19], sizes = [16, 288], strides = [1, 1]} : vector<16x342xbf16> to vector<16x288xbf16>
    %8 = vector.extract_strided_slice %1 {offsets = [0, 20], sizes = [16, 288], strides = [1, 1]} : vector<16x342xbf16> to vector<16x288xbf16>
    %9 = vector.extract_strided_slice %1 {offsets = [0, 36], sizes = [16, 288], strides = [1, 1]} : vector<16x342xbf16> to vector<16x288xbf16>
    %10 = vector.extract_strided_slice %1 {offsets = [0, 37], sizes = [16, 288], strides = [1, 1]} : vector<16x342xbf16> to vector<16x288xbf16>
    %11 = vector.extract_strided_slice %1 {offsets = [0, 38], sizes = [16, 288], strides = [1, 1]} : vector<16x342xbf16> to vector<16x288xbf16>
    %12 = tpu.concatenate %3, %4, %5, %6, %7, %8, %9, %10, %11 in 0 : vector<16x288xbf16>, vector<16x288xbf16>, vector<16x288xbf16>, vector<16x288xbf16>, vector<16x288xbf16>, vector<16x288xbf16>, vector<16x288xbf16>, vector<16x288xbf16>, vector<16x288xbf16> -> vector<144x288xbf16>
    %cst = arith.constant dense<0.000000e+00> : vector<32x288xf32>
    %13 = tpu.matmul %2, %12, %cst {dimension_numbers = #tpu.dot_dimension_numbers<[1], [0], [0], [1], [0, 0, 1, 1], [], []>} : vector<32x144xbf16>, vector<144x288xbf16>, vector<32x288xf32> -> vector<32x288xf32>
    %c0_4 = arith.constant 0 : index
    %c0_5 = arith.constant 0 : index
    %14 = vector.load %arg3[%c0_4, %c0_5] : memref<32x1xf32, #tpu.memory_space<vmem>>, vector<32x1xf32>
    %15 = vector.broadcast %14 : vector<32x1xf32> to vector<32x288xf32>
    %16 = arith.addf %13, %15 : vector<32x288xf32>
    %cst_6 = arith.constant 0.000000e+00 : f32
    %17 = vector.broadcast %cst_6 : f32 to vector<32x288xf32>
    %18 = arith.maximumf %16, %17 : vector<32x288xf32>
    %c0_7 = arith.constant 0 : index
    %c0_8 = arith.constant 0 : index
    %c0_9 = arith.constant 0 : index
    %19 = vector.load %arg4[%c0_7, %c0_8, %c0_9] : memref<1x32x288xf32, #tpu.memory_space<vmem>>, vector<1x32x288xf32>
    %20 = vector.shape_cast %19 : vector<1x32x288xf32> to vector<32x288xf32>
    %21 = vector.shape_cast %18 : vector<32x288xf32> to vector<1x32x288xf32>
    tpu.vector_store %arg4[%c0_7, %c0_8, %c0_9], %21 {strides = array<i32>} : memref<1x32x288xf32, #tpu.memory_space<vmem>>, vector<1x32x288xf32>,
    return
  }
  func.func @transform_0(%arg0: i32) -> (i32, i32, i32) {
    %c0_i32 = arith.constant 0 : i32
    %c0_i32_0 = arith.constant 0 : i32
    %c0_i32_1 = arith.constant 0 : i32
    return %arg0, %c0_i32, %c0_i32_0 : i32, i32, i32
  }
  func.func @transform_1(%arg0: i32) -> (i32, i32) {
    %c0_i32 = arith.constant 0 : i32
    %c0_i32_0 = arith.constant 0 : i32
    %c0_i32_1 = arith.constant 0 : i32
    return %c0_i32, %c0_i32_0 : i32, i32
  }
  func.func @transform_2(%arg0: i32) -> (i32, i32) {
    %c0_i32 = arith.constant 0 : i32
    %c0_i32_0 = arith.constant 0 : i32
    %c0_i32_1 = arith.constant 0 : i32
    return %c0_i32, %c0_i32_0 : i32, i32
  }
  func.func @transform_3(%arg0: i32) -> (i32, i32, i32) {
    %c0_i32 = arith.constant 0 : i32
    %c0_i32_0 = arith.constant 0 : i32
    %c0_i32_1 = arith.constant 0 : i32
    return %arg0, %c0_i32, %c0_i32_0 : i32, i32, i32
  }
}

</mosaic_0001>

<llo_original>
// kernel: basic_conv2d.1
$region0: #{basic_conv2d.1}
  #allocation0 [shape = 'u32[]', space=smem, size = 0x4, offset = 0x4, fixed_abs, tag = 'smem constant byte address 0x4 - core index']
  #allocation1 [shape = 'u32[144,128]{1,0:T(1,128)}', space=vmem, size = 0x12000, scoped, tag = 'internal scratch']
  %s0 = inlined_call_operand.vmem [shape: bf16[2,16,342], index: 0, kind: input, shape index: {}]
  %s1 = inlined_call_operand.vmem [shape: bf16[32,144], index: 1, kind: input, shape index: {}]
  %s2 = inlined_call_operand.vmem [shape: f32[32,1], index: 2, kind: input, shape index: {}]
  %s3 = inlined_call_operand.vmem [shape: f32[2,32,288], index: 3, kind: output, shape index: {}]
  %s4 = sld [smem:[#allocation0]]
  $region45: #{basic_conv2d.1} parent=0
    _
  %s6 = ssub.s32 1, %s4
  %s7 = scalar_select 0, %s6, %s4
  loop: start=0, step=1, limit=4
  $region2: #{basic_conv2d.1} parent=0 // loop_pre_header
    _
  $region3: #{basic_conv2d.1} parent=0 // loop_header
    %s9 = sphi 0, %s13
    %p10 = scmp.ge.s32.totalorder %s9, 4
    %s19 = sphi 0, %s21
    %s22 = sphi 0, %s19
    %s23 = sphi 0, %s22
    %s39 = sphi 0, %s23
    %s43 = sphi 0, %s43
    %s45 = sphi 0, %s43
    %s46 = sphi 0, %s45
    %s60 = sphi 0, %s46
    %s64 = sphi 0, %s64
    %s66 = sphi 0, %s64
    %s67 = sphi 0, %s66
    %s81 = sphi 0, %s67
    %s87 = sphi 0, %s89
    %s90 = sphi 0, %s87
    %s91 = sphi 0, %s90
    %s107 = sphi 0, %s91
  $region4: #{basic_conv2d.1} parent=0 // loop_header_branch
    %12 = sbr.rel (%p10) target = $region8
  $region5: #{basic_conv2d.1} parent=0 // loop_body
    %s14 = ssub.s32 %s9, 1
    %s15 = ssub.s32 %s9, 2
    %s16 = sadd.s32 %s9, 1
    %s17 = ssub.s32 %s9, %s16
    %p18 = scmp.eq.s32.totalorder %s17, 0
    %s20 = sadd.s32 %s19, 1
    %s21 = scalar_select %p18, %s19, %s20
    %p24 = pneg %p18
    %p25 = scmp.eq.s32.totalorder %s9, 1
    %p26 = por %p24, %p25
    %p27 = scmp.ne.s32.totalorder %s19, %s22
    %p28 = scmp.eq.s32.totalorder %s9, 0
    %p29 = por %p27, %p28
    %p30 = scmp.ne.s32.totalorder %s19, %s22
    %p31 = scmp.eq.s32.totalorder %s14, 1
    %p32 = por %p30, %p31
    %p33 = scmp.ne.s32.totalorder %s22, %s23
    %p34 = scmp.eq.s32.totalorder %s14, 0
    %p35 = por %p33, %p34
    %p36 = scmp.ne.s32.totalorder %s22, %s23
    %p37 = scmp.eq.s32.totalorder %s15, 1
    %p38 = por %p36, %p37
    %p40 = scmp.ne.s32.totalorder %s23, %s39
    %p41 = scmp.eq.s32.totalorder %s15, 0
    %p42 = por %p40, %p41
    %s44 = sadd.s32 %s43, 1
    %p47 = scmp.eq.s32.totalorder %s9, 1
    %p48 = scmp.ne.s32.totalorder %s43, %s45
    %p49 = scmp.eq.s32.totalorder %s9, 0
    %p50 = por %p48, %p49
    %p51 = scmp.ne.s32.totalorder %s43, %s45
    %p52 = scmp.eq.s32.totalorder %s14, 1
    %p53 = por %p51, %p52
    %p54 = scmp.ne.s32.totalorder %s45, %s46
    %p55 = scmp.eq.s32.totalorder %s14, 0
    %p56 = por %p54, %p55
    %p57 = scmp.ne.s32.totalorder %s45, %s46
    %p58 = scmp.eq.s32.totalorder %s15, 1
    %p59 = por %p57, %p58
    %p61 = scmp.ne.s32.totalorder %s46, %s60
    %p62 = scmp.eq.s32.totalorder %s15, 0
    %p63 = por %p61, %p62
    %s65 = sadd.s32 %s64, 1
    %p68 = scmp.eq.s32.totalorder %s9, 1
    %p69 = scmp.ne.s32.totalorder %s64, %s66
    %p70 = scmp.eq.s32.totalorder %s9, 0
    %p71 = por %p69, %p70
    %p72 = scmp.ne.s32.totalorder %s64, %s66
    %p73 = scmp.eq.s32.totalorder %s14, 1
    %p74 = por %p72, %p73
    %p75 = scmp.ne.s32.totalorder %s66, %s67
    %p76 = scmp.eq.s32.totalorder %s14, 0
    %p77 = por %p75, %p76
    %p78 = scmp.ne.s32.totalorder %s66, %s67
    %p79 = scmp.eq.s32.totalorder %s15, 1
    %p80 = por %p78, %p79
    %p82 = scmp.ne.s32.totalorder %s67, %s81
    %p83 = scmp.eq.s32.totalorder %s15, 0
    %p84 = por %p82, %p83
    %s85 = ssub.s32 %s9, %s16
    %p86 = scmp.eq.s32.totalorder %s85, 0
    %s88 = sadd.s32 %s87, 1
    %s89 = scalar_select %p86, %s87, %s88
    %p92 = pneg %p86
    %p93 = scmp.eq.s32.totalorder %s9, 1
    %p94 = por %p92, %p93
    %p95 = scmp.ne.s32.totalorder %s87, %s90
    %p96 = scmp.eq.s32.totalorder %s9, 0
    %p97 = por %p95, %p96
    %p98 = scmp.ne.s32.totalorder %s87, %s90
    %p99 = scmp.eq.s32.totalorder %s14, 1
    %p100 = por %p98, %p99
    %p101 = scmp.ne.s32.totalorder %s90, %s91
    %p102 = scmp.eq.s32.totalorder %s14, 0
    %p103 = por %p101, %p102
    %p104 = scmp.ne.s32.totalorder %s90, %s91
    %p105 = scmp.eq.s32.totalorder %s15, 1
    %p106 = por %p104, %p105
    %p108 = scmp.ne.s32.totalorder %s91, %s107
    %p109 = scmp.eq.s32.totalorder %s15, 0
    %p110 = por %p108, %p109
    %p111 = scmp.le.s32.totalorder 1, %s9
    %p112 = scmp.lt.s32.totalorder %s9, 3
    %p113 = pnand %p111, %p112
    %p114 = pneg %p113
    // Predicated region
    $region9: #{basic_conv2d.1} parent=5 // pred_check
      _
    $region10: #{basic_conv2d.1} parent=5 // pred_check_branch
      %116 = sbr.rel (%p113) target = $region12
    $region11: #{basic_conv2d.1} parent=5 // pred_region
      %s117 = ssub.s32 %s9, 1
      // Predicated region
      $region13: #{basic_conv2d.1} parent=11 // pred_check
        %p118 = pneg %p56
      $region14: #{basic_conv2d.1} parent=11 // pred_check_branch
        %120 = sbr.rel (%p118) target = $region16
      $region15: #{basic_conv2d.1} parent=11 // pred_region
        _
      $region16: #{basic_conv2d.1} parent=11 // pred_fallthru
        _
      // Predicated region
      $region17: #{basic_conv2d.1} parent=11 // pred_check
        %p121 = pneg %p77
      $region18: #{basic_conv2d.1} parent=11 // pred_check_branch
        %123 = sbr.rel (%p121) target = $region20
      $region19: #{basic_conv2d.1} parent=11 // pred_region
        _
      $region20: #{basic_conv2d.1} parent=11 // pred_fallthru
        _
    $region12: #{basic_conv2d.1} parent=5 // pred_fallthru
      _
    %p124 = scmp.lt.s32.totalorder %s9, 2
    // Predicated region
    $region21: #{basic_conv2d.1} parent=5 // pred_check
      %p125 = pneg %p124
    $region22: #{basic_conv2d.1} parent=5 // pred_check_branch
      %127 = sbr.rel (%p125) target = $region24
    $region23: #{basic_conv2d.1} parent=5 // pred_region
      // Predicated region
      $region25: #{basic_conv2d.1} parent=23 // pred_check
        %p128 = pneg %p29
      $region26: #{basic_conv2d.1} parent=23 // pred_check_branch
        %130 = sbr.rel (%p128) target = $region28
      $region27: #{basic_conv2d.1} parent=23 // pred_region
        %p131 = scmp.lt.s32.totalorder %s9, 1
        %s132 = scalar_select %p131, %s9, 1
        %s133 = smul.addr %s132, 6
        %s134 = smul.addr %s133, 4
        %s135 = scalar_lea.vmem %s0, %s134
      $region28: #{basic_conv2d.1} parent=23 // pred_fallthru
        _
    $region24: #{basic_conv2d.1} parent=5 // pred_fallthru
      _
    %p136 = scmp.le.s32.totalorder 1, %s9
    %p137 = scmp.lt.s32.totalorder %s9, 3
    %p138 = pnand %p136, %p137
    %p139 = pneg %p138
    // Predicated region
    $region29: #{basic_conv2d.1} parent=5 // pred_check
      _
    $region30: #{basic_conv2d.1} parent=5 // pred_check_branch
      %141 = sbr.rel (%p138) target = $region32
    $region31: #{basic_conv2d.1} parent=5 // pred_region
      %s142 = ssub.s32 %s9, 1
      %p143 = scmp.lt.s32.totalorder %s14, 1
      %s144 = scalar_select %p143, %s14, 1
      %s145 = smul.addr %s144, 6
      %s146 = smul.addr %s145, 4
      %s147 = scalar_lea.vmem %s0, %s146
      %p148 = pneg %p35
      %p149 = pneg %p32
      %p150 = pneg %p56
      %p151 = pneg %p53
      %p152 = pneg %p77
      %p153 = pneg %p74
      %p154 = pneg %p103
      %p155 = pneg %p100
      %p156 = scmp.lt.s32.totalorder %s14, 1
      %s157 = scalar_select %p156, %s14, 1
      %s158 = smul.addr %s157, 12
      %s159 = smul.addr %s158, 8
      %s160 = scalar_lea.vmem %s3, %s159
      %p161 = scmp.lt.s32.totalorder %s14, 1
      %s162 = scalar_select %p161, %s14, 1
      %s163 = smul.addr %s162, 6
      %s164 = smul.addr %s163, 4
      %s165 = scalar_lea.vmem %s0, %s164
      %p166 = scmp.lt.s32.totalorder %s14, 1
      %s167 = scalar_select %p166, %s14, 1
      %s168 = smul.addr %s167, 12
      %s169 = smul.addr %s168, 8
      %s170 = scalar_lea.vmem %s3, %s169
      %v172 = vld [vmem:[%s165] sm:$0xff]
      %v173 = vld [vmem:[%s165 + $0x8] sm:$0xf]
      %v174 = vld [vmem:[%s165 + $0xc] sm:$0xff]
      %v175 = vld [vmem:[%s165 + $0x14] sm:$0xf]
      %v176 = vld [vmem:[%s1] sm:$0xff]
      %v177 = vld [vmem:[%s1 + $0x8] sm:$0xff]
      %v178 = vld [vmem:[%s1 + $0x10] sm:$0xff]
      %v179 = vld [vmem:[%s1 + $0x18] sm:$0xff]
      %v184 = vunpack.c.l.b16 %v172
      %v185 = vunpack.c.h.b16 %v172
      %v186 = vunpack.c.l.b16 %v173
      %v187 = vunpack.c.l.b16 %v174
      %v188 = vunpack.c.h.b16 %v174
      %v189 = vunpack.c.l.b16 %v175
      %v190 = vpack.c.b16 %v187, %v184
      %v191 = vpack.c.b16 %v188, %v185
      %v192 = vpack.c.b16 %v189, %v186
      %196 = vrot.lane.b32.xlu0 %v190, 127
      %v197 = vpop.permute.xlu0 %196
      %198 = vrot.lane.b32.xlu0 %v191, 127
      %v199 = vpop.permute.xlu0 %198
      %200 = vrot.lane.b32.xlu0 %v192, 127
      %v201 = vpop.permute.xlu0 %200
      %vm202 = vcmask 1039360
      %v203 = vsel %vm202, %v197, %v199
      %v204 = vsel %vm202, %v199, %v201
      %208 = vrot.lane.b32.xlu0 %v190, 126
      %v209 = vpop.permute.xlu0 %208
      %210 = vrot.lane.b32.xlu0 %v191, 126
      %v211 = vpop.permute.xlu0 %210
      %212 = vrot.lane.b32.xlu0 %v192, 126
      %v213 = vpop.permute.xlu0 %212
      %vm214 = vcmask 1031168
      %v215 = vsel %vm214, %v209, %v211
      %v216 = vsel %vm214, %v211, %v213
      %220 = vrot.lane.b32.xlu0 %v190, 110
      %v221 = vpop.permute.xlu0 %220
      %222 = vrot.lane.b32.xlu0 %v191, 110
      %v223 = vpop.permute.xlu0 %222
      %224 = vrot.lane.b32.xlu0 %v192, 110
      %v225 = vpop.permute.xlu0 %224
      %vm226 = vcmask 900096
      %v227 = vsel %vm226, %v221, %v223
      %v228 = vsel %vm226, %v223, %v225
      %232 = vrot.lane.b32.xlu0 %v190, 109
      %v233 = vpop.permute.xlu0 %232
      %234 = vrot.lane.b32.xlu0 %v191, 109
      %v235 = vpop.permute.xlu0 %234
      %236 = vrot.lane.b32.xlu0 %v192, 109
      %v237 = vpop.permute.xlu0 %236
      %vm238 = vcmask 891904
      %v239 = vsel %vm238, %v233, %v235
      %v240 = vsel %vm238, %v235, %v237
      %244 = vrot.lane.b32.xlu0 %v190, 108
      %v245 = vpop.permute.xlu0 %244
      %246 = vrot.lane.b32.xlu0 %v191, 108
      %v247 = vpop.permute.xlu0 %246
      %248 = vrot.lane.b32.xlu0 %v192, 108
      %v249 = vpop.permute.xlu0 %248
      %vm250 = vcmask 883712
      %v251 = vsel %vm250, %v245, %v247
      %v252 = vsel %vm250, %v247, %v249
      %256 = vrot.lane.b32.xlu0 %v190, 92
      %v257 = vpop.permute.xlu0 %256
      %258 = vrot.lane.b32.xlu0 %v191, 92
      %v259 = vpop.permute.xlu0 %258
      %260 = vrot.lane.b32.xlu0 %v192, 92
      %v261 = vpop.permute.xlu0 %260
      %vm262 = vcmask 752640
      %v263 = vsel %vm262, %v257, %v259
      %v264 = vsel %vm262, %v259, %v261
      %268 = vrot.lane.b32.xlu0 %v190, 91
      %v269 = vpop.permute.xlu0 %268
      %270 = vrot.lane.b32.xlu0 %v191, 91
      %v271 = vpop.permute.xlu0 %270
      %272 = vrot.lane.b32.xlu0 %v192, 91
      %v273 = vpop.permute.xlu0 %272
      %vm274 = vcmask 744448
      %v275 = vsel %vm274, %v269, %v271
      %v276 = vsel %vm274, %v271, %v273
      %280 = vrot.lane.b32.xlu0 %v190, 90
      %v281 = vpop.permute.xlu0 %280
      %282 = vrot.lane.b32.xlu0 %v191, 90
      %v283 = vpop.permute.xlu0 %282
      %284 = vrot.lane.b32.xlu0 %v192, 90
      %v285 = vpop.permute.xlu0 %284
      %vm286 = vcmask 736256
      %v287 = vsel %vm286, %v281, %v283
      %v288 = vsel %vm286, %v283, %v285
      %v292 = vld [vmem:[%s2] sm:$0xff]
      %v293 = vld [vmem:[%s2 + $0x8] sm:$0xff]
      %v294 = vld [vmem:[%s2 + $0x10] sm:$0xff]
      %v295 = vld [vmem:[%s2 + $0x18] sm:$0xff]
      %297 = vset.pattern.permute.xlu0 0
      %298 = vperm.xlu0 %297, %v292
      %v299 = vpop.permute.xlu0 %298
      %302 = vset.pattern.permute.xlu0 0
      %303 = vperm.xlu0 %302, %v293
      %v304 = vpop.permute.xlu0 %303
      %307 = vset.pattern.permute.xlu0 0
      %308 = vperm.xlu0 %307, %v294
      %v309 = vpop.permute.xlu0 %308
      %312 = vset.pattern.permute.xlu0 0
      %313 = vperm.xlu0 %312, %v295
      %v314 = vpop.permute.xlu0 %313
      %v320 = vunpack.c.l.b16 %v176
      %v321 = vunpack.c.h.b16 %v176
      %v322 = vunpack.c.l.b16 %v177
      %v323 = vunpack.c.h.b16 %v177
      %v324 = vunpack.c.l.b16 %v178
      %v325 = vunpack.c.h.b16 %v178
      %v326 = vunpack.c.l.b16 %v179
      %v327 = vunpack.c.h.b16 %v179
      %v328 = vpack.c.b16 %v322, %v320
      %v329 = vpack.c.b16 %v323, %v321
      %v330 = vpack.c.b16 %v326, %v324
      %v331 = vpack.c.b16 %v327, %v325
      %vm334 = vcmask 130048
      %v336 = vsel %vm334, %v329, 0
      %v339 = vsel %vm334, %v331, 0
      %341 = vmatprep.subr.bf16.mxu0 %v191
      %342 = vmatpush1.bf16.msra.mxu0 %v190
      %343 = vmatprep.subr.bf16.mxu0 %v204
      %344 = vmatpush1.bf16.msra.mxu0 %v203
      %345 = vmatprep.subr.bf16.mxu0 %v216
      %346 = vmatpush1.bf16.msra.mxu0 %v215
      %347 = vmatprep.subr.bf16.mxu0 %v228
      %348 = vmatpush1.bf16.msra.mxu0 %v227
      %349 = vmatprep.subr.bf16.mxu0 %v240
      %350 = vmatpush1.bf16.msra.mxu0 %v239
      %351 = vmatprep.subr.bf16.mxu0 %v252
      %352 = vmatpush1.bf16.msra.mxu0 %v251
      %353 = vmatprep.subr.bf16.mxu0 %v264
      %354 = vmatpush1.bf16.msra.mxu0 %v263
      %355 = vmatprep.subr.bf16.mxu0 %v276
      %356 = vmatpush1.bf16.msra.mxu0 %v275
      %357 = vmatprep.subr.bf16.mxu0 %v288
      %358 = vmatpush1.bf16.msra.mxu0 %v287
      %359 = vmatprep.subr.bf16.mxu0 0
      %360 = vmatpush1.bf16.msra.mxu0 0
      %361 = vmatprep.subr.bf16.mxu0 0
      %362 = vmatpush1.bf16.msra.mxu0 0
      %363 = vmatprep.subr.bf16.mxu0 0
      %364 = vmatpush1.bf16.msra.mxu0 0
      %365 = vmatprep.subr.bf16.mxu0 0
      %366 = vmatpush1.bf16.msra.mxu0 0
      %367 = vmatprep.subr.bf16.mxu0 0
      %368 = vmatpush1.bf16.msra.mxu0 0
      %369 = vmatprep.subr.bf16.mxu0 0
      %370 = vmatpush1.bf16.msra.mxu0 0
      %371 = vmatprep.subr.bf16.mxu0 0
      %372 = vmatpush1.bf16.msra.mxu0 0
      %373 = vmatprep.mubr.bf16.mxu0 %v336
      %374 = vmatmul.mubr.bf16.gmra.mrb[0].mxu0 %v328
      %v375 = vpop.f32.mrb[0].mxu0
      %v376 = vadd.f32 %v299, %v375
      %v377 = vpop.f32.mrb[0].mxu0
      %v378 = vadd.f32 %v299, %v377
      %v379 = vpop.f32.mrb[0].mxu0
      %v380 = vadd.f32 %v304, %v379
      %v381 = vpop.f32.mrb[0].mxu0
      %v382 = vadd.f32 %v304, %v381
      %383 = vmatprep.mubr.bf16.mxu0 %v339
      %384 = vmatmul.mubr.bf16.gmra.mrb[0].mxu0 %v330
      %v385 = vpop.f32.mrb[0].mxu0
      %v386 = vadd.f32 %v309, %v385
      %v387 = vpop.f32.mrb[0].mxu0
      %v388 = vadd.f32 %v309, %v387
      %v389 = vpop.f32.mrb[0].mxu0
      %v390 = vadd.f32 %v314, %v389
      %v391 = vpop.f32.mrb[0].mxu0
      %v392 = vadd.f32 %v314, %v391
      %393 = vdwg.mxu0
      %394 = vmatprep.subr.bf16.mxu0 0
      %395 = vmatpush1.bf16.msra.mxu0 %v192
      %396 = vmatprep.subr.bf16.mxu0 0
      %397 = vmatpush1.bf16.msra.mxu0 %v201
      %398 = vmatprep.subr.bf16.mxu0 0
      %399 = vmatpush1.bf16.msra.mxu0 %v213
      %400 = vmatprep.subr.bf16.mxu0 0
      %401 = vmatpush1.bf16.msra.mxu0 %v225
      %402 = vmatprep.subr.bf16.mxu0 0
      %403 = vmatpush1.bf16.msra.mxu0 %v237
      %404 = vmatprep.subr.bf16.mxu0 0
      %405 = vmatpush1.bf16.msra.mxu0 %v249
      %406 = vmatprep.subr.bf16.mxu0 0
      %407 = vmatpush1.bf16.msra.mxu0 %v261
      %408 = vmatprep.subr.bf16.mxu0 0
      %409 = vmatpush1.bf16.msra.mxu0 %v273
      %410 = vmatprep.subr.bf16.mxu0 0
      %411 = vmatpush1.bf16.msra.mxu0 %v285
      %412 = vmatprep.subr.bf16.mxu0 0
      %413 = vmatpush1.bf16.msra.mxu0 0
      %414 = vmatprep.subr.bf16.mxu0 0
      %415 = vmatpush1.bf16.msra.mxu0 0
      %416 = vmatprep.subr.bf16.mxu0 0
      %417 = vmatpush1.bf16.msra.mxu0 0
      %418 = vmatprep.subr.bf16.mxu0 0
      %419 = vmatpush1.bf16.msra.mxu0 0
      %420 = vmatprep.subr.bf16.mxu0 0
      %421 = vmatpush1.bf16.msra.mxu0 0
      %422 = vmatprep.subr.bf16.mxu0 0
      %423 = vmatpush1.bf16.msra.mxu0 0
      %424 = vmatprep.subr.bf16.mxu0 0
      %425 = vmatpush1.bf16.msra.mxu0 0
      %426 = vmatprep.mubr.bf16.mxu0 %v336
      %427 = vmatmul.mubr.bf16.gmra.mrb[0].mxu0 %v328
      %v428 = vpop.f32.mrb[0].mxu0
      %v429 = vadd.f32 %v299, %v428
      %v430 = vpop.f32.mrb[0].mxu0
      %v431 = vpop.f32.mrb[0].mxu0
      %v432 = vadd.f32 %v304, %v431
      %v433 = vpop.f32.mrb[0].mxu0
      %434 = vmatprep.mubr.bf16.mxu0 %v339
      %435 = vmatmul.mubr.bf16.gmra.mrb[0].mxu0 %v330
      %v436 = vpop.f32.mrb[0].mxu0
      %v437 = vadd.f32 %v309, %v436
      %v438 = vpop.f32.mrb[0].mxu0
      %v439 = vpop.f32.mrb[0].mxu0
      %v440 = vadd.f32 %v314, %v439
      %v441 = vpop.f32.mrb[0].mxu0
      %442 = vdwg.mxu0
      %v443 = vmax.f32 %v376, 0.0
      %v444 = vmax.f32 %v378, 0.0
      %v445 = vmax.f32 %v429, 0.0
      %v446 = vmax.f32 %v380, 0.0
      %v447 = vmax.f32 %v382, 0.0
      %v448 = vmax.f32 %v432, 0.0
      %v449 = vmax.f32 %v386, 0.0
      %v450 = vmax.f32 %v388, 0.0
      %v451 = vmax.f32 %v437, 0.0
      %v452 = vmax.f32 %v390, 0.0
      %v453 = vmax.f32 %v392, 0.0
      %v454 = vmax.f32 %v440, 0.0
      %455 = vst [vmem:[%s170] sm:$0xff] %v443
      %456 = vst [vmem:[%s170 + $0x8] sm:$0xff] %v444
      %vm457 = vcmask 261120
      %458 = vst.msk [vmem:[%s170 + $0x10] sm:$0xff] %vm457, %v445
      %459 = vst [vmem:[%s170 + $0x18] sm:$0xff] %v446
      %460 = vst [vmem:[%s170 + $0x20] sm:$0xff] %v447
      %461 = vst.msk [vmem:[%s170 + $0x28] sm:$0xff] %vm457, %v448
      %462 = vst [vmem:[%s170 + $0x30] sm:$0xff] %v449
      %463 = vst [vmem:[%s170 + $0x38] sm:$0xff] %v450
      %464 = vst.msk [vmem:[%s170 + $0x40] sm:$0xff] %vm457, %v451
      %465 = vst [vmem:[%s170 + $0x48] sm:$0xff] %v452
      %466 = vst [vmem:[%s170 + $0x50] sm:$0xff] %v453
      %467 = vst.msk [vmem:[%s170 + $0x58] sm:$0xff] %vm457, %v454
      %p468 = scmp.lt.s32.totalorder %s14, 1
      %s469 = scalar_select %p468, %s14, 1
      %s470 = smul.addr %s469, 12
      %s471 = smul.addr %s470, 8
      %s472 = scalar_lea.vmem %s3, %s471
      // Predicated region
      $region33: #{basic_conv2d.1} parent=31 // pred_check
        %p473 = pneg %p100
      $region34: #{basic_conv2d.1} parent=31 // pred_check_branch
        %475 = sbr.rel (%p473) target = $region36
      $region35: #{basic_conv2d.1} parent=31 // pred_region
        _
      $region36: #{basic_conv2d.1} parent=31 // pred_fallthru
        _
    $region32: #{basic_conv2d.1} parent=5 // pred_fallthru
      _
    %p476 = scmp.le.s32.totalorder 2, %s9
    // Predicated region
    $region37: #{basic_conv2d.1} parent=5 // pred_check
      %p477 = pneg %p476
    $region38: #{basic_conv2d.1} parent=5 // pred_check_branch
      %479 = sbr.rel (%p477) target = $region40
    $region39: #{basic_conv2d.1} parent=5 // pred_region
      %s480 = ssub.s32 %s9, 2
      // Predicated region
      $region41: #{basic_conv2d.1} parent=39 // pred_check
        %p481 = pneg %p106
      $region42: #{basic_conv2d.1} parent=39 // pred_check_branch
        %483 = sbr.rel (%p481) target = $region44
      $region43: #{basic_conv2d.1} parent=39 // pred_region
        %p484 = scmp.lt.s32.totalorder %s15, 1
        %s485 = scalar_select %p484, %s15, 1
        %s486 = smul.addr %s485, 12
        %s487 = smul.addr %s486, 8
        %s488 = scalar_lea.vmem %s3, %s487
      $region44: #{basic_conv2d.1} parent=39 // pred_fallthru
        _
    $region40: #{basic_conv2d.1} parent=5 // pred_fallthru
      _
  $region6: #{basic_conv2d.1} parent=0 // loop_footer
    %s13 = sadd.s32 1, %s9
  $region7: #{basic_conv2d.1} parent=0 // loop_footer_branch
    %8 = sbr.rel target = $region3
  $region8: #{basic_conv2d.1} parent=0 // loop_exit
    _

</llo_original>
